<compile_context>
chip_gen: v7x
topology: tpu7x:2x2x1
jax: 0.10.0
libtpu: 0.0.40
codegen_flags: <defaults>
</compile_context>

<pallas_src>
import jax
import jax.numpy as jnp
from jax.experimental import pallas as pl
from jax.experimental.pallas import tpu as pltpu


def _round_up(n, m):
    return ((n + m - 1) // m) * m


def _vmem_cap_bytes():
    # Generation-aware cap: leave ~16 MiB headroom for compiler-internal scratch.
    # v7x has 64 MiB/TC physical VMEM; v5e/v6e have 128 MiB.
    try:
        phys = int(getattr(pltpu.get_tpu_info(), "vmem_capacity_bytes", 64 << 20))
    except Exception:
        phys = 64 << 20
    return max(phys - (16 << 20), 16 << 20)


def qnet_kernel(x_ref, w1_ref, b1_ref, w2_ref, b2_ref, w3_ref, b3_ref, o_ref):
    # Layer 1: cast the f32 x tile to bf16 in-kernel, MXU matmul, f32 accumulate,
    # bias + ReLU on the f32 accumulator.
    x_bf = x_ref[...].astype(jnp.bfloat16)
    h1 = jnp.dot(x_bf, w1_ref[...], preferred_element_type=jnp.float32)
    h1 = jnp.maximum(h1 + b1_ref[...], 0.0)
    # Layer 2: cast activations back to bf16 for the MXU, accumulate in f32.
    h2 = jnp.dot(h1.astype(jnp.bfloat16), w2_ref[...], preferred_element_type=jnp.float32)
    h2 = jnp.maximum(h2 + b2_ref[...], 0.0)
    # Output layer (out width 1): VPU multiply + lane reduction instead of an N=1 MXU matmul.
    w3_row = w3_ref[...].astype(jnp.float32)                      # (1, H2)
    q = jnp.sum(h2 * w3_row, axis=-1, keepdims=True) + b3_ref[...]
    o_ref[...] = q.astype(o_ref.dtype)


def qnetwork_forward(x, params, tile_b=1024):
    """x: [B, num_inputs + num_actions] f32.

    params (kernel-ready, as produced by init_qnetwork_params):
      w1: [in_dim, H1] bf16, b1: [1, H1] f32,
      w2: [H1,  H2] bf16, b2: [1, H2] f32,
      w3: [1,   H2] bf16, b3: [1, 1 ] f32.
    Returns q: [B, 1] f32.

    tile_b: batch tile upper bound.  1024 is safe everywhere; raise to 2048-4096 on v6e for
    large batches (the vmem_limit computation below scales accordingly).  The tile is always
    capped at ~ceil(B/2) so the grid has >=2 steps and both v7x TensorCores get work.
    """
    w1, b1, w2, b2, w3, b3 = params
    B, in_dim = x.shape
    H1, H2 = w1.shape[1], w2.shape[1]
    assert w1.shape[0] == in_dim

    # No-ops when params are already stored kernel-ready (bf16 weights, f32 row biases).
    w1 = w1.astype(jnp.bfloat16)
    w2 = w2.astype(jnp.bfloat16)
    w3_row = w3.reshape(1, H2).astype(jnp.bfloat16)
    b1 = b1.reshape(1, H1).astype(jnp.float32)
    b2 = b2.reshape(1, H2).astype(jnp.float32)
    b3 = b3.reshape(1, 1).astype(jnp.float32)

    # Batch tile: multiple of 16 (sublane/bf16 packing); capped so the grid has >=2 steps when
    # B allows (v7x megacore).  The last block may be partial (tail rows are independent and
    # their OOB writes are masked), so no wrapper-side batch padding is needed.
    half_b = _round_up(pl.cdiv(B, 2), 16)
    TILE_B = max(16, min(_round_up(int(tile_b), 16), half_b))
    num_tiles = pl.cdiv(B, TILE_B)

    # VMEM budget: double-buffered x/out tiles + (double-buffered) resident weights +
    # f32/bf16 activation temporaries; clamped to a generation-aware cap.
    weight_bytes = (in_dim * H1 + H1 * H2 + H2) * 2 + (H1 + H2 + 1) * 4
    io_bytes = TILE_B * (in_dim * 4 + 4)                       # f32 x tile + f32 out tile
    act_bytes = TILE_B * (in_dim * 2 + H1 * 6 + H2 * 4)        # bf16 x, h1 f32+bf16, h2 f32
    request = 2 * io_bytes + 2 * weight_bytes + act_bytes + (4 << 20)
    vmem_limit = int(min(max(request, 16 << 20), _vmem_cap_bytes()))

    cost = pl.CostEstimate(
        flops=2 * B * (in_dim * H1 + H1 * H2 + H2),
        transcendentals=0,
        bytes_accessed=B * (in_dim * 4 + 4) + weight_bytes,
    )

    out = pl.pallas_call(
        qnet_kernel,
        out_shape=jax.ShapeDtypeStruct((B, 1), jnp.float32),
        grid=(num_tiles,),
        in_specs=[
            pl.BlockSpec((TILE_B, in_dim), lambda i: (i, 0)),  # x tile (pipelined, f32)
            pl.BlockSpec((in_dim, H1), lambda i: (0, 0)),      # w1 (resident)
            pl.BlockSpec((1, H1), lambda i: (0, 0)),           # b1
            pl.BlockSpec((H1, H2), lambda i: (0, 0)),          # w2
            pl.BlockSpec((1, H2), lambda i: (0, 0)),           # b2
            pl.BlockSpec((1, H2), lambda i: (0, 0)),           # w3 as a broadcast row
            pl.BlockSpec((1, 1), lambda i: (0, 0)),            # b3
        ],
        out_specs=pl.BlockSpec((TILE_B, 1), lambda i: (i, 0)),
        compiler_params=pltpu.CompilerParams(
            dimension_semantics=("parallel",),
            vmem_limit_bytes=vmem_limit,
        ),
        cost_estimate=cost,
    )(x, w1, b1, w2, b2, w3_row, b3)

    return out


def xavier_uniform(key, fan_in, fan_out, dtype=jnp.float32):
    limit = jnp.sqrt(6.0 / (fan_in + fan_out))
    return jax.random.uniform(key, (fan_in, fan_out), dtype, minval=-limit, maxval=limit)


def init_qnetwork_params(key, num_inputs, num_actions, hidden_units=(256, 256)):
    """Kernel-ready params: bf16 weights stored [in, out] (transpose of nn.Linear's [out, in]),
    f32 row biases, and the final weight pre-reshaped to a (1, H2) row."""
    in_dim = num_inputs + num_actions
    dims = [in_dim, *hidden_units, 1]
    ws, bs = [], []
    for i in range(len(dims) - 1):
        key, sub = jax.random.split(key)
        ws.append(xavier_uniform(sub, dims[i], dims[i + 1]))
        bs.append(jnp.zeros((1, dims[i + 1]), dtype=jnp.float32))
    w1 = ws[0].astype(jnp.bfloat16)
    w2 = ws[1].astype(jnp.bfloat16)
    w3 = ws[2].reshape(1, dims[-2]).astype(jnp.bfloat16)   # (1, H2) row
    return (w1, bs[0], w2, bs[1], w3, bs[2])


if __name__ == "__main__":
    # Small shapes consistent with the module: state 24 + action 8 = 32 inputs,
    # module-default hidden [256, 256]; batch 200 with tile_b=128 exercises the
    # >=2-step batch grid (tiles of 112 + 88) and the partial-last-block path.
    batch = 200
    num_inputs, num_actions = 24, 8
    hidden_units = (256, 256)

    key = jax.random.PRNGKey(0)
    key, pkey, xkey = jax.random.split(key, 3)

    params = init_qnetwork_params(pkey, num_inputs, num_actions, hidden_units)
    x = jax.random.normal(xkey, (batch, num_inputs + num_actions), dtype=jnp.float32)

    q = qnetwork_forward(x, params, tile_b=128)
    jax.block_until_ready(q)

    # Pure-JAX reference mimicking the kernel numerics (bf16 operands, f32 accumulation).
    w1, b1, w2, b2, w3, b3 = params
    f32 = jnp.float32
    xb = x.astype(jnp.bfloat16).astype(f32)
    w1f = w1.astype(f32)
    w2f = w2.astype(f32)
    w3f = w3.astype(f32)                      # (1, H2)
    h1 = jnp.maximum(xb @ w1f + b1, 0.0)
    h2 = jnp.maximum(h1.astype(jnp.bfloat16).astype(f32) @ w2f + b2, 0.0)
    ref = h2 @ w3f.T + b3

    assert q.shape == (batch, 1)
    assert jnp.allclose(q, ref, atol=1e-2, rtol=1e-2), float(jnp.max(jnp.abs(q - ref)))

    print("KERNEL_OK")
</pallas_src>

<mosaic_0001>
module attributes {stable_mosaic.version = 11 : i64} {
  func.func @qnet_kernel(%arg0: i32, %arg1: memref<112x32xf32, #tpu.memory_space<vmem>>, %arg2: memref<32x256xbf16, #tpu.memory_space<vmem>>, %arg3: memref<1x256xf32, #tpu.memory_space<vmem>>, %arg4: memref<256x256xbf16, #tpu.memory_space<vmem>>, %arg5: memref<1x256xf32, #tpu.memory_space<vmem>>, %arg6: memref<1x256xbf16, #tpu.memory_space<vmem>>, %arg7: memref<1x1xf32, #tpu.memory_space<vmem>>, %arg8: memref<112x1xf32, #tpu.memory_space<vmem>>) attributes {dimension_semantics = [#tpu.dimension_semantics<parallel>], iteration_bounds = array<i64: 2>, scalar_prefetch = 0 : i64, scratch_operands = 0 : i64, tpu.core_type = #tpu.core_type<tc>, window_params = [{transform_indices = @transform_0, window_bounds = array<i64: 112, 32>}, {pipeline_mode = #tpu.pipeline_mode<synchronous>, transform_indices = @transform_1, window_bounds = array<i64: 32, 256>}, {pipeline_mode = #tpu.pipeline_mode<synchronous>, transform_indices = @transform_2, window_bounds = array<i64: 1, 256>}, {pipeline_mode = #tpu.pipeline_mode<synchronous>, transform_indices = @transform_3, window_bounds = array<i64: 256, 256>}, {pipeline_mode = #tpu.pipeline_mode<synchronous>, transform_indices = @transform_4, window_bounds = array<i64: 1, 256>}, {pipeline_mode = #tpu.pipeline_mode<synchronous>, transform_indices = @transform_5, window_bounds = array<i64: 1, 256>}, {pipeline_mode = #tpu.pipeline_mode<synchronous>, transform_indices = @transform_6, window_bounds = array<i64: 1, 1>}, {transform_indices = @transform_7, window_bounds = array<i64: 112, 1>}]} {
    %c0 = arith.constant 0 : index
    %c0_0 = arith.constant 0 : index
    %0 = vector.load %arg1[%c0, %c0_0] : memref<112x32xf32, #tpu.memory_space<vmem>>, vector<112x32xf32>
    %1 = arith.truncf %0 : vector<112x32xf32> to vector<112x32xbf16>
    %c0_1 = arith.constant 0 : index
    %c0_2 = arith.constant 0 : index
    %2 = vector.load %arg2[%c0_1, %c0_2] : memref<32x256xbf16, #tpu.memory_space<vmem>>, vector<32x256xbf16>
    %cst = arith.constant dense<0.000000e+00> : vector<112x256xf32>
    %3 = tpu.matmul %1, %2, %cst {dimension_numbers = #tpu.dot_dimension_numbers<[1], [0], [0], [1], [0, 0, 1, 1], [], []>} : vector<112x32xbf16>, vector<32x256xbf16>, vector<112x256xf32> -> vector<112x256xf32>
    %c0_3 = arith.constant 0 : index
    %c0_4 = arith.constant 0 : index
    %4 = vector.load %arg3[%c0_3, %c0_4] : memref<1x256xf32, #tpu.memory_space<vmem>>, vector<1x256xf32>
    %5 = vector.broadcast %4 : vector<1x256xf32> to vector<112x256xf32>
    %6 = arith.addf %3, %5 : vector<112x256xf32>
    %cst_5 = arith.constant 0.000000e+00 : f32
    %7 = vector.broadcast %cst_5 : f32 to vector<112x256xf32>
    %8 = arith.maximumf %6, %7 : vector<112x256xf32>
    %9 = arith.truncf %8 : vector<112x256xf32> to vector<112x256xbf16>
    %c0_6 = arith.constant 0 : index
    %c0_7 = arith.constant 0 : index
    %10 = vector.load %arg4[%c0_6, %c0_7] : memref<256x256xbf16, #tpu.memory_space<vmem>>, vector<256x256xbf16>
    %cst_8 = arith.constant dense<0.000000e+00> : vector<112x256xf32>
    %11 = tpu.matmul %9, %10, %cst_8 {dimension_numbers = #tpu.dot_dimension_numbers<[1], [0], [0], [1], [0, 0, 1, 1], [], []>} : vector<112x256xbf16>, vector<256x256xbf16>, vector<112x256xf32> -> vector<112x256xf32>
    %c0_9 = arith.constant 0 : index
    %c0_10 = arith.constant 0 : index
    %12 = vector.load %arg5[%c0_9, %c0_10] : memref<1x256xf32, #tpu.memory_space<vmem>>, vector<1x256xf32>
    %13 = vector.broadcast %12 : vector<1x256xf32> to vector<112x256xf32>
    %14 = arith.addf %11, %13 : vector<112x256xf32>
    %cst_11 = arith.constant 0.000000e+00 : f32
    %15 = vector.broadcast %cst_11 : f32 to vector<112x256xf32>
    %16 = arith.maximumf %14, %15 : vector<112x256xf32>
    %c0_12 = arith.constant 0 : index
    %c0_13 = arith.constant 0 : index
    %17 = vector.load %arg6[%c0_12, %c0_13] : memref<1x256xbf16, #tpu.memory_space<vmem>>, vector<1x256xbf16>
    %18 = arith.extf %17 : vector<1x256xbf16> to vector<1x256xf32>
    %19 = vector.broadcast %18 : vector<1x256xf32> to vector<112x256xf32>
    %20 = arith.mulf %16, %19 : vector<112x256xf32>
    %cst_14 = arith.constant dense<0.000000e+00> : vector<112xf32>
    %21 = vector.multi_reduction <add>, %20, %cst_14 [1] : vector<112x256xf32> to vector<112xf32>
    %22 = vector.shape_cast %21 : vector<112xf32> to vector<112x1xf32>
    %c0_15 = arith.constant 0 : index
    %c0_16 = arith.constant 0 : index
    %23 = vector.load %arg7[%c0_15, %c0_16] : memref<1x1xf32, #tpu.memory_space<vmem>>, vector<1x1xf32>
    %24 = vector.broadcast %23 : vector<1x1xf32> to vector<112x1xf32>
    %25 = arith.addf %22, %24 : vector<112x1xf32>
    %c0_17 = arith.constant 0 : index
    %c0_18 = arith.constant 0 : index
    %26 = vector.load %arg8[%c0_17, %c0_18] : memref<112x1xf32, #tpu.memory_space<vmem>>, vector<112x1xf32>
    tpu.vector_store %arg8[%c0_17, %c0_18], %25 {strides = array<i32>} : memref<112x1xf32, #tpu.memory_space<vmem>>, vector<112x1xf32>,
    return
  }
  func.func @transform_0(%arg0: i32) -> (i32, i32) {
    %c0_i32 = arith.constant 0 : i32
    %c0_i32_0 = arith.constant 0 : i32
    return %arg0, %c0_i32 : i32, i32
  }
  func.func @transform_1(%arg0: i32) -> (i32, i32) {
    %c0_i32 = arith.constant 0 : i32
    %c0_i32_0 = arith.constant 0 : i32
    %c0_i32_1 = arith.constant 0 : i32
    return %c0_i32, %c0_i32_0 : i32, i32
  }
  func.func @transform_2(%arg0: i32) -> (i32, i32) {
    %c0_i32 = arith.constant 0 : i32
    %c0_i32_0 = arith.constant 0 : i32
    %c0_i32_1 = arith.constant 0 : i32
    return %c0_i32, %c0_i32_0 : i32, i32
  }
  func.func @transform_3(%arg0: i32) -> (i32, i32) {
    %c0_i32 = arith.constant 0 : i32
    %c0_i32_0 = arith.constant 0 : i32
    %c0_i32_1 = arith.constant 0 : i32
    return %c0_i32, %c0_i32_0 : i32, i32
  }
  func.func @transform_4(%arg0: i32) -> (i32, i32) {
    %c0_i32 = arith.constant 0 : i32
    %c0_i32_0 = arith.constant 0 : i32
    %c0_i32_1 = arith.constant 0 : i32
    return %c0_i32, %c0_i32_0 : i32, i32
  }
  func.func @transform_5(%arg0: i32) -> (i32, i32) {
    %c0_i32 = arith.constant 0 : i32
    %c0_i32_0 = arith.constant 0 : i32
    %c0_i32_1 = arith.constant 0 : i32
    return %c0_i32, %c0_i32_0 : i32, i32
  }
  func.func @transform_6(%arg0: i32) -> (i32, i32) {
    %c0_i32 = arith.constant 0 : i32
    %c0_i32_0 = arith.constant 0 : i32
    %c0_i32_1 = arith.constant 0 : i32
    return %c0_i32, %c0_i32_0 : i32, i32
  }
  func.func @transform_7(%arg0: i32) -> (i32, i32) {
    %c0_i32 = arith.constant 0 : i32
    %c0_i32_0 = arith.constant 0 : i32
    return %arg0, %c0_i32 : i32, i32
  }
}

</mosaic_0001>

<llo_original>
// kernel: tpu_custom_call.1
$region0: #{tpu_custom_call.1}
  #allocation0 [shape = 'u32[]', space=smem, size = 0x4, offset = 0x4, fixed_abs, tag = 'smem constant byte address 0x4 - core index']
  #allocation1 [shape = 'u32[144,128]{1,0:T(1,128)}', space=vmem, size = 0x12000, scoped, tag = 'internal scratch']
  #allocation2 [shape = 'f32[1,1]{1,0:T(1,128)S(1)}', space=vmem, size = 0x200, scoped, tag = 'scoped memory for tpu_custom_call.1']
  %s0 = inlined_call_operand.vmem [shape: f32[200,32], index: 0, kind: input, shape index: {}]
  %s1 = inlined_call_operand.hbm [shape: bf16[32,256], index: 1, kind: input, shape index: {}]
  %s2 = inlined_call_operand.vmem [shape: f32[1,256], index: 2, kind: input, shape index: {}]
  %s3 = inlined_call_operand.vmem [shape: bf16[256,256], index: 3, kind: input, shape index: {}]
  %s4 = inlined_call_operand.vmem [shape: f32[1,256], index: 4, kind: input, shape index: {}]
  %s5 = inlined_call_operand.vmem [shape: bf16[1,256], index: 5, kind: input, shape index: {}]
  %s6 = inlined_call_operand.<no memory space> [shape: f32[1,1], index: 6, kind: input, shape index: {}]
  %s7 = inlined_call_operand.vmem [shape: f32[200,1], index: 7, kind: output, shape index: {}]
  %s8 = sld [smem:[#allocation0]]
  $region113: #{tpu_custom_call.1} parent=0
    _
  %s10 = ssub.s32 1, %s8
  %s11 = scalar_select 0, %s10, %s8
  %v12 = vstv %s6
  %13 = vst [vmem:[#allocation2] sm:$0x1] %v12
  $region1: #{tpu_custom_call.1} parent=0
    #allocation3 [shape = 'u8[16384]{0}', space=vmem, size = 0x4000, scoped, tag = 'input window, operand 1, single buffered']
    #allocation4 [shape = 's32[2]{0}', space=sflag, size = 0x8, scoped, tag = 'scoped memory for tpu_custom_call.1']
    #allocation5 [shape = 'u8[114688]{0}', space=vmem, size = 0x1c000, scoped, tag = 'output window, operand 0']
    %14 = vsyncpa [#allocation4], 0
    loop: start=0, step=1, limit=4
    $region2: #{tpu_custom_call.1} parent=1 // loop_pre_header
      _
    $region3: #{tpu_custom_call.1} parent=1 // loop_header
      %s16 = sphi 0, %s20
      %p17 = scmp.ge.s32.totalorder %s16, 4
      %s26 = sphi 0, %s28
      %s29 = sphi 0, %s26
      %s30 = sphi 0, %s29
      %s46 = sphi 0, %s30
      %s50 = sphi 0, %s50
      %s52 = sphi 0, %s50
      %s53 = sphi 0, %s52
      %s67 = sphi 0, %s53
      %s71 = sphi 0, %s71
      %s73 = sphi 0, %s71
      %s74 = sphi 0, %s73
      %s88 = sphi 0, %s74
      %s92 = sphi 0, %s92
      %s94 = sphi 0, %s92
      %s95 = sphi 0, %s94
      %s109 = sphi 0, %s95
      %s113 = sphi 0, %s113
      %s115 = sphi 0, %s113
      %s116 = sphi 0, %s115
      %s130 = sphi 0, %s116
      %s134 = sphi 0, %s134
      %s136 = sphi 0, %s134
      %s137 = sphi 0, %s136
      %s151 = sphi 0, %s137
      %s155 = sphi 0, %s155
      %s157 = sphi 0, %s155
      %s158 = sphi 0, %s157
      %s172 = sphi 0, %s158
      %s178 = sphi 0, %s180
      %s181 = sphi 0, %s178
      %s182 = sphi 0, %s181
      %s198 = sphi 0, %s182
    $region4: #{tpu_custom_call.1} parent=1 // loop_header_branch
      %19 = sbr.rel (%p17) target = $region8
    $region5: #{tpu_custom_call.1} parent=1 // loop_body
      %s21 = ssub.s32 %s16, 1
      %s22 = ssub.s32 %s16, 2
      %s23 = sadd.s32 %s16, 1
      %s24 = ssub.s32 %s16, %s23
      %p25 = scmp.eq.s32.totalorder %s24, 0
      %s27 = sadd.s32 %s26, 1
      %s28 = scalar_select %p25, %s26, %s27
      %p31 = pneg %p25
      %p32 = scmp.eq.s32.totalorder %s16, 1
      %p33 = por %p31, %p32
      %p34 = scmp.ne.s32.totalorder %s26, %s29
      %p35 = scmp.eq.s32.totalorder %s16, 0
      %p36 = por %p34, %p35
      %p37 = scmp.ne.s32.totalorder %s26, %s29
      %p38 = scmp.eq.s32.totalorder %s21, 1
      %p39 = por %p37, %p38
      %p40 = scmp.ne.s32.totalorder %s29, %s30
      %p41 = scmp.eq.s32.totalorder %s21, 0
      %p42 = por %p40, %p41
      %p43 = scmp.ne.s32.totalorder %s29, %s30
      %p44 = scmp.eq.s32.totalorder %s22, 1
      %p45 = por %p43, %p44
      %p47 = scmp.ne.s32.totalorder %s30, %s46
      %p48 = scmp.eq.s32.totalorder %s22, 0
      %p49 = por %p47, %p48
      %s51 = sadd.s32 %s50, 1
      %p54 = scmp.eq.s32.totalorder %s16, 1
      %p55 = scmp.ne.s32.totalorder %s50, %s52
      %p56 = scmp.eq.s32.totalorder %s16, 0
      %p57 = por %p55, %p56
      %p58 = scmp.ne.s32.totalorder %s50, %s52
      %p59 = scmp.eq.s32.totalorder %s21, 1
      %p60 = por %p58, %p59
      %p61 = scmp.ne.s32.totalorder %s52, %s53
      %p62 = scmp.eq.s32.totalorder %s21, 0
      %p63 = por %p61, %p62
      %p64 = scmp.ne.s32.totalorder %s52, %s53
      %p65 = scmp.eq.s32.totalorder %s22, 1
      %p66 = por %p64, %p65
      %p68 = scmp.ne.s32.totalorder %s53, %s67
      %p69 = scmp.eq.s32.totalorder %s22, 0
      %p70 = por %p68, %p69
      %s72 = sadd.s32 %s71, 1
      %p75 = scmp.eq.s32.totalorder %s16, 1
      %p76 = scmp.ne.s32.totalorder %s71, %s73
      %p77 = scmp.eq.s32.totalorder %s16, 0
      %p78 = por %p76, %p77
      %p79 = scmp.ne.s32.totalorder %s71, %s73
      %p80 = scmp.eq.s32.totalorder %s21, 1
      %p81 = por %p79, %p80
      %p82 = scmp.ne.s32.totalorder %s73, %s74
      %p83 = scmp.eq.s32.totalorder %s21, 0
      %p84 = por %p82, %p83
      %p85 = scmp.ne.s32.totalorder %s73, %s74
      %p86 = scmp.eq.s32.totalorder %s22, 1
      %p87 = por %p85, %p86
      %p89 = scmp.ne.s32.totalorder %s74, %s88
      %p90 = scmp.eq.s32.totalorder %s22, 0
      %p91 = por %p89, %p90
      %s93 = sadd.s32 %s92, 1
      %p96 = scmp.eq.s32.totalorder %s16, 1
      %p97 = scmp.ne.s32.totalorder %s92, %s94
      %p98 = scmp.eq.s32.totalorder %s16, 0
      %p99 = por %p97, %p98
      %p100 = scmp.ne.s32.totalorder %s92, %s94
      %p101 = scmp.eq.s32.totalorder %s21, 1
      %p102 = por %p100, %p101
      %p103 = scmp.ne.s32.totalorder %s94, %s95
      %p104 = scmp.eq.s32.totalorder %s21, 0
      %p105 = por %p103, %p104
      %p106 = scmp.ne.s32.totalorder %s94, %s95
      %p107 = scmp.eq.s32.totalorder %s22, 1
      %p108 = por %p106, %p107
      %p110 = scmp.ne.s32.totalorder %s95, %s109
      %p111 = scmp.eq.s32.totalorder %s22, 0
      %p112 = por %p110, %p111
      %s114 = sadd.s32 %s113, 1
      %p117 = scmp.eq.s32.totalorder %s16, 1
      %p118 = scmp.ne.s32.totalorder %s113, %s115
      %p119 = scmp.eq.s32.totalorder %s16, 0
      %p120 = por %p118, %p119
      %p121 = scmp.ne.s32.totalorder %s113, %s115
      %p122 = scmp.eq.s32.totalorder %s21, 1
      %p123 = por %p121, %p122
      %p124 = scmp.ne.s32.totalorder %s115, %s116
      %p125 = scmp.eq.s32.totalorder %s21, 0
      %p126 = por %p124, %p125
      %p127 = scmp.ne.s32.totalorder %s115, %s116
      %p128 = scmp.eq.s32.totalorder %s22, 1
      %p129 = por %p127, %p128
      %p131 = scmp.ne.s32.totalorder %s116, %s130
      %p132 = scmp.eq.s32.totalorder %s22, 0
      %p133 = por %p131, %p132
      %s135 = sadd.s32 %s134, 1
      %p138 = scmp.eq.s32.totalorder %s16, 1
      %p139 = scmp.ne.s32.totalorder %s134, %s136
      %p140 = scmp.eq.s32.totalorder %s16, 0
      %p141 = por %p139, %p140
      %p142 = scmp.ne.s32.totalorder %s134, %s136
      %p143 = scmp.eq.s32.totalorder %s21, 1
      %p144 = por %p142, %p143
      %p145 = scmp.ne.s32.totalorder %s136, %s137
      %p146 = scmp.eq.s32.totalorder %s21, 0
      %p147 = por %p145, %p146
      %p148 = scmp.ne.s32.totalorder %s136, %s137
      %p149 = scmp.eq.s32.totalorder %s22, 1
      %p150 = por %p148, %p149
      %p152 = scmp.ne.s32.totalorder %s137, %s151
      %p153 = scmp.eq.s32.totalorder %s22, 0
      %p154 = por %p152, %p153
      %s156 = sadd.s32 %s155, 1
      %p159 = scmp.eq.s32.totalorder %s16, 1
      %p160 = scmp.ne.s32.totalorder %s155, %s157
      %p161 = scmp.eq.s32.totalorder %s16, 0
      %p162 = por %p160, %p161
      %p163 = scmp.ne.s32.totalorder %s155, %s157
      %p164 = scmp.eq.s32.totalorder %s21, 1
      %p165 = por %p163, %p164
      %p166 = scmp.ne.s32.totalorder %s157, %s158
      %p167 = scmp.eq.s32.totalorder %s21, 0
      %p168 = por %p166, %p167
      %p169 = scmp.ne.s32.totalorder %s157, %s158
      %p170 = scmp.eq.s32.totalorder %s22, 1
      %p171 = por %p169, %p170
      %p173 = scmp.ne.s32.totalorder %s158, %s172
      %p174 = scmp.eq.s32.totalorder %s22, 0
      %p175 = por %p173, %p174
      %s176 = ssub.s32 %s16, %s23
      %p177 = scmp.eq.s32.totalorder %s176, 0
      %s179 = sadd.s32 %s178, 1
      %s180 = scalar_select %p177, %s178, %s179
      %p183 = pneg %p177
      %p184 = scmp.eq.s32.totalorder %s16, 1
      %p185 = por %p183, %p184
      %p186 = scmp.ne.s32.totalorder %s178, %s181
      %p187 = scmp.eq.s32.totalorder %s16, 0
      %p188 = por %p186, %p187
      %p189 = scmp.ne.s32.totalorder %s178, %s181
      %p190 = scmp.eq.s32.totalorder %s21, 1
      %p191 = por %p189, %p190
      %p192 = scmp.ne.s32.totalorder %s181, %s182
      %p193 = scmp.eq.s32.totalorder %s21, 0
      %p194 = por %p192, %p193
      %p195 = scmp.ne.s32.totalorder %s181, %s182
      %p196 = scmp.eq.s32.totalorder %s22, 1
      %p197 = por %p195, %p196
      %p199 = scmp.ne.s32.totalorder %s182, %s198
      %p200 = scmp.eq.s32.totalorder %s22, 0
      %p201 = por %p199, %p200
      %p202 = scmp.le.s32.totalorder 1, %s16
      %p203 = scmp.lt.s32.totalorder %s16, 3
      %p204 = pnand %p202, %p203
      %p205 = pneg %p204
      // Predicated region
      $region9: #{tpu_custom_call.1} parent=5 // pred_check
        _
      $region10: #{tpu_custom_call.1} parent=5 // pred_check_branch
        %207 = sbr.rel (%p204) target = $region12
      $region11: #{tpu_custom_call.1} parent=5 // pred_region
        %s208 = ssub.s32 %s16, 1
        // Predicated region
        $region13: #{tpu_custom_call.1} parent=11 // pred_check
          %p209 = pneg %p63
        $region14: #{tpu_custom_call.1} parent=11 // pred_check_branch
          %211 = sbr.rel (%p209) target = $region16
        $region15: #{tpu_custom_call.1} parent=11 // pred_region
          %s213 = ssub.s32 512, 512
          %214 = vsyncadd [#allocation4], %s213
          %s215 = sshll.u32 [#allocation3], 4
          %s216 = int_to_ptr.vmem [resolvable:$true] %s215
          %221 = dma.hbm_to_vmem [thread:$0]  %s1, 512, %s216, [#allocation4], 128, 128, 8
        $region16: #{tpu_custom_call.1} parent=11 // pred_fallthru
          _
        // Predicated region
        $region17: #{tpu_custom_call.1} parent=11 // pred_check
          %p222 = pneg %p84
        $region18: #{tpu_custom_call.1} parent=11 // pred_check_branch
          %224 = sbr.rel (%p222) target = $region20
        $region19: #{tpu_custom_call.1} parent=11 // pred_region
          _
        $region20: #{tpu_custom_call.1} parent=11 // pred_fallthru
          _
        // Predicated region
        $region21: #{tpu_custom_call.1} parent=11 // pred_check
          %p225 = pneg %p105
        $region22: #{tpu_custom_call.1} parent=11 // pred_check_branch
          %227 = sbr.rel (%p225) target = $region24
        $region23: #{tpu_custom_call.1} parent=11 // pred_region
          _
        $region24: #{tpu_custom_call.1} parent=11 // pred_fallthru
          _
        // Predicated region
        $region25: #{tpu_custom_call.1} parent=11 // pred_check
          %p228 = pneg %p126
        $region26: #{tpu_custom_call.1} parent=11 // pred_check_branch
          %230 = sbr.rel (%p228) target = $region28
        $region27: #{tpu_custom_call.1} parent=11 // pred_region
          _
        $region28: #{tpu_custom_call.1} parent=11 // pred_fallthru
          _
        // Predicated region
        $region29: #{tpu_custom_call.1} parent=11 // pred_check
          %p231 = pneg %p147
        $region30: #{tpu_custom_call.1} parent=11 // pred_check_branch
          %233 = sbr.rel (%p231) target = $region32
        $region31: #{tpu_custom_call.1} parent=11 // pred_region
          _
        $region32: #{tpu_custom_call.1} parent=11 // pred_fallthru
          _
        // Predicated region
        $region33: #{tpu_custom_call.1} parent=11 // pred_check
          %p234 = pneg %p168
        $region34: #{tpu_custom_call.1} parent=11 // pred_check_branch
          %236 = sbr.rel (%p234) target = $region36
        $region35: #{tpu_custom_call.1} parent=11 // pred_region
          _
        $region36: #{tpu_custom_call.1} parent=11 // pred_fallthru
          _
      $region12: #{tpu_custom_call.1} parent=5 // pred_fallthru
        _
      %p237 = scmp.lt.s32.totalorder %s16, 2
      // Predicated region
      $region37: #{tpu_custom_call.1} parent=5 // pred_check
        %p238 = pneg %p237
      $region38: #{tpu_custom_call.1} parent=5 // pred_check_branch
        %240 = sbr.rel (%p238) target = $region40
      $region39: #{tpu_custom_call.1} parent=5 // pred_region
        // Predicated region
        $region41: #{tpu_custom_call.1} parent=39 // pred_check
          %p241 = pneg %p36
        $region42: #{tpu_custom_call.1} parent=39 // pred_check_branch
          %243 = sbr.rel (%p241) target = $region44
        $region43: #{tpu_custom_call.1} parent=39 // pred_region
          %s244 = smul.u32 14, %s16
          %s245 = ssub.s32 25, %s244
          %p246 = scmp.lt.s32.totalorder %s245, 14
          %s247 = scalar_select %p246, %s245, 14
          %s248 = smul.u32 128, %s247
          %p249 = scmp.lt.s32.totalorder %s244, 24
          %s250 = scalar_select %p249, %s244, 24
          %s251 = smul.addr %s250, 8
          %s252 = scalar_lea.vmem %s0, %s251
          %s253 = smul.u32 14, %s16
          %s254 = ssub.s32 25, %s253
          %p255 = scmp.lt.s32.totalorder %s254, 14
          %s256 = scalar_select %p255, %s254, 14
          %s257 = smul.u32 128, %s256
        $region44: #{tpu_custom_call.1} parent=39 // pred_fallthru
          _
      $region40: #{tpu_custom_call.1} parent=5 // pred_fallthru
        _
      %p258 = scmp.le.s32.totalorder 1, %s16
      %p259 = scmp.lt.s32.totalorder %s16, 3
      %p260 = pnand %p258, %p259
      %p261 = pneg %p260
      // Predicated region
      $region45: #{tpu_custom_call.1} parent=5 // pred_check
        _
      $region46: #{tpu_custom_call.1} parent=5 // pred_check_branch
        %263 = sbr.rel (%p260) target = $region48
      $region47: #{tpu_custom_call.1} parent=5 // pred_region
        %s264 = ssub.s32 %s16, 1
        // Predicated region
        $region49: #{tpu_custom_call.1} parent=47 // pred_check
          %p265 = pneg %p63
        $region50: #{tpu_custom_call.1} parent=47 // pred_check_branch
          %267 = sbr.rel (%p265) target = $region52
        $region51: #{tpu_custom_call.1} parent=47 // pred_region
          %268 = dma.done [#allocation4], 512
        $region52: #{tpu_custom_call.1} parent=47 // pred_fallthru
          _
        %s269 = smul.u32 14, %s21
        %s270 = ssub.s32 25, %s269
        %p271 = scmp.lt.s32.totalorder %s270, 14
        %s272 = scalar_select %p271, %s270, 14
        %s273 = smul.u32 128, %s272
        %p274 = scmp.lt.s32.totalorder %s269, 24
        %s275 = scalar_select %p274, %s269, 24
        %s276 = smul.addr %s275, 8
        %s277 = scalar_lea.vmem %s0, %s276
        %p278 = pneg %p42
        %p279 = pneg %p39
        %p280 = pneg %p63
        %p281 = pneg %p60
        %p282 = pneg %p84
        %p283 = pneg %p81
        %p284 = pneg %p105
        %p285 = pneg %p102
        %p286 = pneg %p126
        %p287 = pneg %p123
        %p288 = pneg %p147
        %p289 = pneg %p144
        %p290 = pneg %p168
        %p291 = pneg %p165
        %p292 = pneg %p194
        %p293 = pneg %p191
        %s294 = sand.u32 %s181, 1
        %s295 = sand.u32 %s181, 1
        %s296 = smul.addr %s295, 112
        %s297 = scalar_lea.vmem [#allocation5], %s296
        %s298 = smul.u32 14, %s21
        %s299 = ssub.s32 25, %s298
        %p300 = scmp.lt.s32.totalorder %s299, 14
        %s301 = scalar_select %p300, %s299, 14
        %s302 = smul.u32 128, %s301
        %p303 = scmp.lt.s32.totalorder %s298, 24
        %s304 = scalar_select %p303, %s298, 24
        %s305 = smul.addr %s304, 8
        %s306 = scalar_lea.vmem %s0, %s305
        %s307 = smul.u32 14, %s21
        %s308 = ssub.s32 25, %s307
        %p309 = scmp.lt.s32.totalorder %s308, 14
        %s310 = scalar_select %p309, %s308, 14
        %s311 = smul.u32 128, %s310
        %s312 = smul.u32 14, %s21
        %s313 = ssub.s32 25, %s312
        %p314 = scmp.lt.s32.totalorder %s313, 14
        %s315 = scalar_select %p314, %s313, 14
        %s316 = smul.u32 128, %s315
        %v318 = vld [vmem:[%s306] sm:$0xff]
        %v319 = vld [vmem:[%s306 + $0x8] sm:$0xff]
        %v320 = vld [vmem:[%s306 + $0x10] sm:$0xff]
        %v321 = vld [vmem:[%s306 + $0x18] sm:$0xff]
        %v322 = vld [vmem:[%s306 + $0x20] sm:$0xff]
        %v323 = vld [vmem:[%s306 + $0x28] sm:$0xff]
        %v324 = vld [vmem:[%s306 + $0x30] sm:$0xff]
        %v325 = vld [vmem:[%s306 + $0x38] sm:$0xff]
        %v326 = vld [vmem:[%s306 + $0x40] sm:$0xff]
        %v327 = vld [vmem:[%s306 + $0x48] sm:$0xff]
        %v328 = vld [vmem:[%s306 + $0x50] sm:$0xff]
        %v329 = vld [vmem:[%s306 + $0x58] sm:$0xff]
        %v330 = vld [vmem:[%s306 + $0x60] sm:$0xff]
        %v331 = vld [vmem:[%s306 + $0x68] sm:$0xff]
        %v332 = vpack.c.bf16 %v319, %v318
        %v333 = vpack.c.bf16 %v321, %v320
        %v334 = vpack.c.bf16 %v323, %v322
        %v335 = vpack.c.bf16 %v325, %v324
        %v336 = vpack.c.bf16 %v327, %v326
        %v337 = vpack.c.bf16 %v329, %v328
        %v338 = vpack.c.bf16 %v331, %v330
        %v339 = vld [vmem:[#allocation3] sm:$0xff]
        %v340 = vld [vmem:[#allocation3 + $0x8] sm:$0xff]
        %v341 = vld [vmem:[#allocation3 + $0x10] sm:$0xff]
        %v342 = vld [vmem:[#allocation3 + $0x18] sm:$0xff]
        %v343 = vld [vmem:[%s2] sm:$0x3]
        %v345 = vlaneseq
        %v346 = vshrl.u32 %v345, 7
        %v347 = vsub.s32 0, %v346
        %v348 = vrot.slane %v343, %v347
        %v349 = vlaneseq
        %v350 = vshrl.u32 %v349, 7
        %v351 = vsub.s32 1, %v350
        %v352 = vrot.slane %v343, %v351
        %v359 = vunpack.c.l.b16 %v339
        %v360 = vunpack.c.h.b16 %v339
        %v361 = vunpack.c.l.b16 %v340
        %v362 = vunpack.c.h.b16 %v340
        %v363 = vunpack.c.l.b16 %v341
        %v364 = vunpack.c.h.b16 %v341
        %v365 = vunpack.c.l.b16 %v342
        %v366 = vunpack.c.h.b16 %v342
        %v367 = vpack.c.b16 %v361, %v359
        %v368 = vpack.c.b16 %v362, %v360
        %v369 = vpack.c.b16 %v365, %v363
        %v370 = vpack.c.b16 %v366, %v364
        %vm375 = vcmask 261120
        %v377 = vsel %vm375, %v332, 0
        %v380 = vsel %vm375, %v333, 0
        %v383 = vsel %vm375, %v334, 0
        %v386 = vsel %vm375, %v335, 0
        %v389 = vsel %vm375, %v336, 0
        %v392 = vsel %vm375, %v337, 0
        %v395 = vsel %vm375, %v338, 0
        %397 = vmatprep.subr.bf16.mxu0 %v368
        %398 = vmatpush1.bf16.msra.mxu0 %v367
        %399 = vmatprep.subr.bf16.mxu0 %v370
        %400 = vmatpush1.bf16.msra.mxu0 %v369
        %401 = vmatprep.subr.bf16.mxu0 0
        %402 = vmatpush1.bf16.msra.mxu0 0
        %403 = vmatprep.subr.bf16.mxu0 0
        %404 = vmatpush1.bf16.msra.mxu0 0
        %405 = vmatprep.subr.bf16.mxu0 0
        %406 = vmatpush1.bf16.msra.mxu0 0
        %407 = vmatprep.subr.bf16.mxu0 0
        %408 = vmatpush1.bf16.msra.mxu0 0
        %409 = vmatprep.subr.bf16.mxu0 0
        %410 = vmatpush1.bf16.msra.mxu0 0
        %411 = vmatprep.subr.bf16.mxu0 0
        %412 = vmatpush1.bf16.msra.mxu0 0
        %413 = vmatprep.subr.bf16.mxu0 0
        %414 = vmatpush1.bf16.msra.mxu0 0
        %415 = vmatprep.subr.bf16.mxu0 0
        %416 = vmatpush1.bf16.msra.mxu0 0
        %417 = vmatprep.subr.bf16.mxu0 0
        %418 = vmatpush1.bf16.msra.mxu0 0
        %419 = vmatprep.subr.bf16.mxu0 0
        %420 = vmatpush1.bf16.msra.mxu0 0
        %421 = vmatprep.subr.bf16.mxu0 0
        %422 = vmatpush1.bf16.msra.mxu0 0
        %423 = vmatprep.subr.bf16.mxu0 0
        %424 = vmatpush1.bf16.msra.mxu0 0
        %425 = vmatprep.subr.bf16.mxu0 0
        %426 = vmatpush1.bf16.msra.mxu0 0
        %427 = vmatprep.subr.bf16.mxu0 0
        %428 = vmatpush1.bf16.msra.mxu0 0
        %429 = vmatprep.mubr.bf16.mxu0 0
        %430 = vmatmul.mubr.bf16.gmra.mrb[0].mxu0 %v377
        %v431 = vpop.f32.mrb[0].mxu0
        %v432 = vadd.f32 %v348, %v431
        %v433 = vpop.f32.mrb[0].mxu0
        %v434 = vadd.f32 %v352, %v433
        %v435 = vpop.f32.mrb[0].mxu0
        %v436 = vadd.f32 %v348, %v435
        %v437 = vpop.f32.mrb[0].mxu0
        %v438 = vadd.f32 %v352, %v437
        %439 = vmatprep.mubr.bf16.mxu0 0
        %440 = vmatmul.mubr.bf16.gmra.mrb[0].mxu0 %v380
        %v441 = vpop.f32.mrb[0].mxu0
        %v442 = vadd.f32 %v348, %v441
        %v443 = vpop.f32.mrb[0].mxu0
        %v444 = vadd.f32 %v352, %v443
        %v445 = vpop.f32.mrb[0].mxu0
        %v446 = vadd.f32 %v348, %v445
        %v447 = vpop.f32.mrb[0].mxu0
        %v448 = vadd.f32 %v352, %v447
        %449 = vmatprep.mubr.bf16.mxu0 0
        %450 = vmatmul.mubr.bf16.gmra.mrb[0].mxu0 %v383
        %v451 = vpop.f32.mrb[0].mxu0
        %v452 = vadd.f32 %v348, %v451
        %v453 = vpop.f32.mrb[0].mxu0
        %v454 = vadd.f32 %v352, %v453
        %v455 = vpop.f32.mrb[0].mxu0
        %v456 = vadd.f32 %v348, %v455
        %v457 = vpop.f32.mrb[0].mxu0
        %v458 = vadd.f32 %v352, %v457
        %459 = vmatprep.mubr.bf16.mxu0 0
        %460 = vmatmul.mubr.bf16.gmra.mrb[0].mxu0 %v386
        %v461 = vpop.f32.mrb[0].mxu0
        %v462 = vadd.f32 %v348, %v461
        %v463 = vpop.f32.mrb[0].mxu0
        %v464 = vadd.f32 %v352, %v463
        %v465 = vpop.f32.mrb[0].mxu0
        %v466 = vadd.f32 %v348, %v465
        %v467 = vpop.f32.mrb[0].mxu0
        %v468 = vadd.f32 %v352, %v467
        %469 = vmatprep.mubr.bf16.mxu0 0
        %470 = vmatmul.mubr.bf16.gmra.mrb[0].mxu0 %v389
        %v471 = vpop.f32.mrb[0].mxu0
        %v472 = vadd.f32 %v348, %v471
        %v473 = vpop.f32.mrb[0].mxu0
        %v474 = vadd.f32 %v352, %v473
        %v475 = vpop.f32.mrb[0].mxu0
        %v476 = vadd.f32 %v348, %v475
        %v477 = vpop.f32.mrb[0].mxu0
        %v478 = vadd.f32 %v352, %v477
        %479 = vmatprep.mubr.bf16.mxu0 0
        %480 = vmatmul.mubr.bf16.gmra.mrb[0].mxu0 %v392
        %v481 = vpop.f32.mrb[0].mxu0
        %v482 = vadd.f32 %v348, %v481
        %v483 = vpop.f32.mrb[0].mxu0
        %v484 = vadd.f32 %v352, %v483
        %v485 = vpop.f32.mrb[0].mxu0
        %v486 = vadd.f32 %v348, %v485
        %v487 = vpop.f32.mrb[0].mxu0
        %v488 = vadd.f32 %v352, %v487
        %489 = vmatprep.mubr.bf16.mxu0 0
        %490 = vmatmul.mubr.bf16.gmra.mrb[0].mxu0 %v395
        %v491 = vpop.f32.mrb[0].mxu0
        %v492 = vadd.f32 %v348, %v491
        %v493 = vpop.f32.mrb[0].mxu0
        %v494 = vadd.f32 %v352, %v493
        %v495 = vpop.f32.mrb[0].mxu0
        %v496 = vadd.f32 %v348, %v495
        %v497 = vpop.f32.mrb[0].mxu0
        %v498 = vadd.f32 %v352, %v497
        %499 = vdwg.mxu0
        %v500 = vmax.f32 %v432, 0.0
        %v501 = vmax.f32 %v434, 0.0
        %v502 = vmax.f32 %v436, 0.0
        %v503 = vmax.f32 %v438, 0.0
        %v504 = vmax.f32 %v442, 0.0
        %v505 = vmax.f32 %v444, 0.0
        %v506 = vmax.f32 %v446, 0.0
        %v507 = vmax.f32 %v448, 0.0
        %v508 = vmax.f32 %v452, 0.0
        %v509 = vmax.f32 %v454, 0.0
        %v510 = vmax.f32 %v456, 0.0
        %v511 = vmax.f32 %v458, 0.0
        %v512 = vmax.f32 %v462, 0.0
        %v513 = vmax.f32 %v464, 0.0
        %v514 = vmax.f32 %v466, 0.0
        %v515 = vmax.f32 %v468, 0.0
        %v516 = vmax.f32 %v472, 0.0
        %v517 = vmax.f32 %v474, 0.0
        %v518 = vmax.f32 %v476, 0.0
        %v519 = vmax.f32 %v478, 0.0
        %v520 = vmax.f32 %v482, 0.0
        %v521 = vmax.f32 %v484, 0.0
        %v522 = vmax.f32 %v486, 0.0
        %v523 = vmax.f32 %v488, 0.0
        %v524 = vmax.f32 %v492, 0.0
        %v525 = vmax.f32 %v494, 0.0
        %v526 = vmax.f32 %v496, 0.0
        %v527 = vmax.f32 %v498, 0.0
        %v528 = vpack.c.bf16 %v502, %v500
        %v529 = vpack.c.bf16 %v503, %v501
        %v530 = vpack.c.bf16 %v506, %v504
        %v531 = vpack.c.bf16 %v507, %v505
        %v532 = vpack.c.bf16 %v510, %v508
        %v533 = vpack.c.bf16 %v511, %v509
        %v534 = vpack.c.bf16 %v514, %v512
        %v535 = vpack.c.bf16 %v515, %v513
        %v536 = vpack.c.bf16 %v518, %v516
        %v537 = vpack.c.bf16 %v519, %v517
        %v538 = vpack.c.bf16 %v522, %v520
        %v539 = vpack.c.bf16 %v523, %v521
        %v540 = vpack.c.bf16 %v526, %v524
        %v541 = vpack.c.bf16 %v527, %v525
        %v542 = vld [vmem:[%s3] sm:$0xff]
        %v543 = vld [vmem:[%s3 + $0x8] sm:$0xff]
        %v544 = vld [vmem:[%s3 + $0x10] sm:$0xff]
        %v545 = vld [vmem:[%s3 + $0x18] sm:$0xff]
        %v546 = vld [vmem:[%s3 + $0x20] sm:$0xff]
        %v547 = vld [vmem:[%s3 + $0x28] sm:$0xff]
        %v548 = vld [vmem:[%s3 + $0x30] sm:$0xff]
        %v549 = vld [vmem:[%s3 + $0x38] sm:$0xff]
        %v550 = vld [vmem:[%s3 + $0x40] sm:$0xff]
        %v551 = vld [vmem:[%s3 + $0x48] sm:$0xff]
        %v552 = vld [vmem:[%s3 + $0x50] sm:$0xff]
        %v553 = vld [vmem:[%s3 + $0x58] sm:$0xff]
        %v554 = vld [vmem:[%s3 + $0x60] sm:$0xff]
        %v555 = vld [vmem:[%s3 + $0x68] sm:$0xff]
        %v556 = vld [vmem:[%s3 + $0x70] sm:$0xff]
        %v557 = vld [vmem:[%s3 + $0x78] sm:$0xff]
        %v558 = vld [vmem:[%s3 + $0x80] sm:$0xff]
        %v559 = vld [vmem:[%s3 + $0x88] sm:$0xff]
        %v560 = vld [vmem:[%s3 + $0x90] sm:$0xff]
        %v561 = vld [vmem:[%s3 + $0x98] sm:$0xff]
        %v562 = vld [vmem:[%s3 + $0xa0] sm:$0xff]
        %v563 = vld [vmem:[%s3 + $0xa8] sm:$0xff]
        %v564 = vld [vmem:[%s3 + $0xb0] sm:$0xff]
        %v565 = vld [vmem:[%s3 + $0xb8] sm:$0xff]
        %v566 = vld [vmem:[%s3 + $0xc0] sm:$0xff]
        %v567 = vld [vmem:[%s3 + $0xc8] sm:$0xff]
        %v568 = vld [vmem:[%s3 + $0xd0] sm:$0xff]
        %v569 = vld [vmem:[%s3 + $0xd8] sm:$0xff]
        %v570 = vld [vmem:[%s3 + $0xe0] sm:$0xff]
        %v571 = vld [vmem:[%s3 + $0xe8] sm:$0xff]
        %v572 = vld [vmem:[%s3 + $0xf0] sm:$0xff]
        %v573 = vld [vmem:[%s3 + $0xf8] sm:$0xff]
        %v574 = vld [vmem:[%s4] sm:$0x3]
        %v576 = vlaneseq
        %v577 = vshrl.u32 %v576, 7
        %v578 = vsub.s32 0, %v577
        %v579 = vrot.slane %v574, %v578
        %v580 = vlaneseq
        %v581 = vshrl.u32 %v580, 7
        %v582 = vsub.s32 1, %v581
        %v583 = vrot.slane %v574, %v582
        %v618 = vunpack.c.l.b16 %v542
        %v619 = vunpack.c.h.b16 %v542
        %v620 = vunpack.c.l.b16 %v543
        %v621 = vunpack.c.h.b16 %v543
        %v622 = vunpack.c.l.b16 %v544
        %v623 = vunpack.c.h.b16 %v544
        %v624 = vunpack.c.l.b16 %v545
        %v625 = vunpack.c.h.b16 %v545
        %v626 = vunpack.c.l.b16 %v546
        %v627 = vunpack.c.h.b16 %v546
        %v628 = vunpack.c.l.b16 %v547
        %v629 = vunpack.c.h.b16 %v547
        %v630 = vunpack.c.l.b16 %v548
        %v631 = vunpack.c.h.b16 %v548
        %v632 = vunpack.c.l.b16 %v549
        %v633 = vunpack.c.h.b16 %v549
        %v634 = vunpack.c.l.b16 %v550
        %v635 = vunpack.c.h.b16 %v550
        %v636 = vunpack.c.l.b16 %v551
        %v637 = vunpack.c.h.b16 %v551
        %v638 = vunpack.c.l.b16 %v552
        %v639 = vunpack.c.h.b16 %v552
        %v640 = vunpack.c.l.b16 %v553
        %v641 = vunpack.c.h.b16 %v553
        %v642 = vunpack.c.l.b16 %v554
        %v643 = vunpack.c.h.b16 %v554
        %v644 = vunpack.c.l.b16 %v555
        %v645 = vunpack.c.h.b16 %v555
        %v646 = vunpack.c.l.b16 %v556
        %v647 = vunpack.c.h.b16 %v556
        %v648 = vunpack.c.l.b16 %v557
        %v649 = vunpack.c.h.b16 %v557
        %v650 = vunpack.c.l.b16 %v558
        %v651 = vunpack.c.h.b16 %v558
        %v652 = vunpack.c.l.b16 %v559
        %v653 = vunpack.c.h.b16 %v559
        %v654 = vunpack.c.l.b16 %v560
        %v655 = vunpack.c.h.b16 %v560
        %v656 = vunpack.c.l.b16 %v561
        %v657 = vunpack.c.h.b16 %v561
        %v658 = vunpack.c.l.b16 %v562
        %v659 = vunpack.c.h.b16 %v562
        %v660 = vunpack.c.l.b16 %v563
        %v661 = vunpack.c.h.b16 %v563
        %v662 = vunpack.c.l.b16 %v564
        %v663 = vunpack.c.h.b16 %v564
        %v664 = vunpack.c.l.b16 %v565
        %v665 = vunpack.c.h.b16 %v565
        %v666 = vunpack.c.l.b16 %v566
        %v667 = vunpack.c.h.b16 %v566
        %v668 = vunpack.c.l.b16 %v567
        %v669 = vunpack.c.h.b16 %v567
        %v670 = vunpack.c.l.b16 %v568
        %v671 = vunpack.c.h.b16 %v568
        %v672 = vunpack.c.l.b16 %v569
        %v673 = vunpack.c.h.b16 %v569
        %v674 = vunpack.c.l.b16 %v570
        %v675 = vunpack.c.h.b16 %v570
        %v676 = vunpack.c.l.b16 %v571
        %v677 = vunpack.c.h.b16 %v571
        %v678 = vunpack.c.l.b16 %v572
        %v679 = vunpack.c.h.b16 %v572
        %v680 = vunpack.c.l.b16 %v573
        %v681 = vunpack.c.h.b16 %v573
        %v682 = vpack.c.b16 %v620, %v618
        %v683 = vpack.c.b16 %v621, %v619
        %v684 = vpack.c.b16 %v624, %v622
        %v685 = vpack.c.b16 %v625, %v623
        %v686 = vpack.c.b16 %v628, %v626
        %v687 = vpack.c.b16 %v629, %v627
        %v688 = vpack.c.b16 %v632, %v630
        %v689 = vpack.c.b16 %v633, %v631
        %v690 = vpack.c.b16 %v636, %v634
        %v691 = vpack.c.b16 %v637, %v635
        %v692 = vpack.c.b16 %v640, %v638
        %v693 = vpack.c.b16 %v641, %v639
        %v694 = vpack.c.b16 %v644, %v642
        %v695 = vpack.c.b16 %v645, %v643
        %v696 = vpack.c.b16 %v648, %v646
        %v697 = vpack.c.b16 %v649, %v647
        %v698 = vpack.c.b16 %v652, %v650
        %v699 = vpack.c.b16 %v653, %v651
        %v700 = vpack.c.b16 %v656, %v654
        %v701 = vpack.c.b16 %v657, %v655
        %v702 = vpack.c.b16 %v660, %v658
        %v703 = vpack.c.b16 %v661, %v659
        %v704 = vpack.c.b16 %v664, %v662
        %v705 = vpack.c.b16 %v665, %v663
        %v706 = vpack.c.b16 %v668, %v666
        %v707 = vpack.c.b16 %v669, %v667
        %v708 = vpack.c.b16 %v672, %v670
        %v709 = vpack.c.b16 %v673, %v671
        %v710 = vpack.c.b16 %v676, %v674
        %v711 = vpack.c.b16 %v677, %v675
        %v712 = vpack.c.b16 %v680, %v678
        %v713 = vpack.c.b16 %v681, %v679
        %746 = vmatprep.subr.bf16.mxu0 %v683
        %747 = vmatpush1.bf16.msra.mxu0 %v682
        %748 = vmatprep.subr.bf16.mxu0 %v685
        %749 = vmatpush1.bf16.msra.mxu0 %v684
        %750 = vmatprep.subr.bf16.mxu0 %v687
        %751 = vmatpush1.bf16.msra.mxu0 %v686
        %752 = vmatprep.subr.bf16.mxu0 %v689
        %753 = vmatpush1.bf16.msra.mxu0 %v688
        %754 = vmatprep.subr.bf16.mxu0 %v691
        %755 = vmatpush1.bf16.msra.mxu0 %v690
        %756 = vmatprep.subr.bf16.mxu0 %v693
        %757 = vmatpush1.bf16.msra.mxu0 %v692
        %758 = vmatprep.subr.bf16.mxu0 %v695
        %759 = vmatpush1.bf16.msra.mxu0 %v694
        %760 = vmatprep.subr.bf16.mxu0 %v697
        %761 = vmatpush1.bf16.msra.mxu0 %v696
        %762 = vmatprep.subr.bf16.mxu0 %v699
        %763 = vmatpush1.bf16.msra.mxu0 %v698
        %764 = vmatprep.subr.bf16.mxu0 %v701
        %765 = vmatpush1.bf16.msra.mxu0 %v700
        %766 = vmatprep.subr.bf16.mxu0 %v703
        %767 = vmatpush1.bf16.msra.mxu0 %v702
        %768 = vmatprep.subr.bf16.mxu0 %v705
        %769 = vmatpush1.bf16.msra.mxu0 %v704
        %770 = vmatprep.subr.bf16.mxu0 %v707
        %771 = vmatpush1.bf16.msra.mxu0 %v706
        %772 = vmatprep.subr.bf16.mxu0 %v709
        %773 = vmatpush1.bf16.msra.mxu0 %v708
        %774 = vmatprep.subr.bf16.mxu0 %v711
        %775 = vmatpush1.bf16.msra.mxu0 %v710
        %776 = vmatprep.subr.bf16.mxu0 %v713
        %777 = vmatpush1.bf16.msra.mxu0 %v712
        %778 = vmatprep.mubr.bf16.mxu0 %v529
        %779 = vmatmul.mubr.bf16.gmra.mrb[0].mxu0 %v528
        %v780 = vpop.f32.mrb[0].mxu0
        %v781 = vadd.f32 %v579, %v780
        %v782 = vpop.f32.mrb[0].mxu0
        %v783 = vadd.f32 %v583, %v782
        %v784 = vpop.f32.mrb[0].mxu0
        %v785 = vadd.f32 %v579, %v784
        %v786 = vpop.f32.mrb[0].mxu0
        %v787 = vadd.f32 %v583, %v786
        %788 = vmatprep.mubr.bf16.mxu0 %v531
        %789 = vmatmul.mubr.bf16.gmra.mrb[0].mxu0 %v530
        %v790 = vpop.f32.mrb[0].mxu0
        %v791 = vadd.f32 %v579, %v790
        %v792 = vpop.f32.mrb[0].mxu0
        %v793 = vadd.f32 %v583, %v792
        %v794 = vpop.f32.mrb[0].mxu0
        %v795 = vadd.f32 %v579, %v794
        %v796 = vpop.f32.mrb[0].mxu0
        %v797 = vadd.f32 %v583, %v796
        %798 = vmatprep.mubr.bf16.mxu0 %v533
        %799 = vmatmul.mubr.bf16.gmra.mrb[0].mxu0 %v532
        %v800 = vpop.f32.mrb[0].mxu0
        %v801 = vadd.f32 %v579, %v800
        %v802 = vpop.f32.mrb[0].mxu0
        %v803 = vadd.f32 %v583, %v802
        %v804 = vpop.f32.mrb[0].mxu0
        %v805 = vadd.f32 %v579, %v804
        %v806 = vpop.f32.mrb[0].mxu0
        %v807 = vadd.f32 %v583, %v806
        %808 = vmatprep.mubr.bf16.mxu0 %v535
        %809 = vmatmul.mubr.bf16.gmra.mrb[0].mxu0 %v534
        %v810 = vpop.f32.mrb[0].mxu0
        %v811 = vadd.f32 %v579, %v810
        %v812 = vpop.f32.mrb[0].mxu0
        %v813 = vadd.f32 %v583, %v812
        %v814 = vpop.f32.mrb[0].mxu0
        %v815 = vadd.f32 %v579, %v814
        %v816 = vpop.f32.mrb[0].mxu0
        %v817 = vadd.f32 %v583, %v816
        %818 = vmatprep.mubr.bf16.mxu0 %v537
        %819 = vmatmul.mubr.bf16.gmra.mrb[0].mxu0 %v536
        %v820 = vpop.f32.mrb[0].mxu0
        %v821 = vadd.f32 %v579, %v820
        %v822 = vpop.f32.mrb[0].mxu0
        %v823 = vadd.f32 %v583, %v822
        %v824 = vpop.f32.mrb[0].mxu0
        %v825 = vadd.f32 %v579, %v824
        %v826 = vpop.f32.mrb[0].mxu0
        %v827 = vadd.f32 %v583, %v826
        %828 = vmatprep.mubr.bf16.mxu0 %v539
        %829 = vmatmul.mubr.bf16.gmra.mrb[0].mxu0 %v538
        %v830 = vpop.f32.mrb[0].mxu0
        %v831 = vadd.f32 %v579, %v830
        %v832 = vpop.f32.mrb[0].mxu0
        %v833 = vadd.f32 %v583, %v832
        %v834 = vpop.f32.mrb[0].mxu0
        %v835 = vadd.f32 %v579, %v834
        %v836 = vpop.f32.mrb[0].mxu0
        %v837 = vadd.f32 %v583, %v836
        %838 = vmatprep.mubr.bf16.mxu0 %v541
        %839 = vmatmul.mubr.bf16.gmra.mrb[0].mxu0 %v540
        %v840 = vpop.f32.mrb[0].mxu0
        %v841 = vadd.f32 %v579, %v840
        %v842 = vpop.f32.mrb[0].mxu0
        %v843 = vadd.f32 %v583, %v842
        %v844 = vpop.f32.mrb[0].mxu0
        %v845 = vadd.f32 %v579, %v844
        %v846 = vpop.f32.mrb[0].mxu0
        %v847 = vadd.f32 %v583, %v846
        %848 = vdwg.mxu0
        %v849 = vmax.f32 %v781, 0.0
        %v850 = vmax.f32 %v783, 0.0
        %v851 = vmax.f32 %v785, 0.0
        %v852 = vmax.f32 %v787, 0.0
        %v853 = vmax.f32 %v791, 0.0
        %v854 = vmax.f32 %v793, 0.0
        %v855 = vmax.f32 %v795, 0.0
        %v856 = vmax.f32 %v797, 0.0
        %v857 = vmax.f32 %v801, 0.0
        %v858 = vmax.f32 %v803, 0.0
        %v859 = vmax.f32 %v805, 0.0
        %v860 = vmax.f32 %v807, 0.0
        %v861 = vmax.f32 %v811, 0.0
        %v862 = vmax.f32 %v813, 0.0
        %v863 = vmax.f32 %v815, 0.0
        %v864 = vmax.f32 %v817, 0.0
        %v865 = vmax.f32 %v821, 0.0
        %v866 = vmax.f32 %v823, 0.0
        %v867 = vmax.f32 %v825, 0.0
        %v868 = vmax.f32 %v827, 0.0
        %v869 = vmax.f32 %v831, 0.0
        %v870 = vmax.f32 %v833, 0.0
        %v871 = vmax.f32 %v835, 0.0
        %v872 = vmax.f32 %v837, 0.0
        %v873 = vmax.f32 %v841, 0.0
        %v874 = vmax.f32 %v843, 0.0
        %v875 = vmax.f32 %v845, 0.0
        %v876 = vmax.f32 %v847, 0.0
        %v877 = vld [vmem:[%s5] sm:$0x3]
        %v878 = vunpack.c.l.bf16 %v877
        %v880 = vlaneseq
        %v881 = vshrl.u32 %v880, 7
        %v882 = vsub.s32 0, %v881
        %v883 = vrot.slane %v878, %v882
        %v884 = vlaneseq
        %v885 = vshrl.u32 %v884, 7
        %v886 = vsub.s32 2, %v885
        %v887 = vrot.slane %v878, %v886
        %v890 = vlaneseq
        %v891 = vshrl.u32 %v890, 7
        %v892 = vsub.s32 0, %v891
        %v893 = vrot.slane %v883, %v892
        %v894 = vlaneseq
        %v895 = vshrl.u32 %v894, 7
        %v896 = vsub.s32 0, %v895
        %v897 = vrot.slane %v887, %v896
        %v898 = vmul.f32 %v849, %v893
        %v899 = vmul.f32 %v850, %v897
        %v900 = vmul.f32 %v851, %v893
        %v901 = vmul.f32 %v852, %v897
        %v902 = vmul.f32 %v853, %v893
        %v903 = vmul.f32 %v854, %v897
        %v904 = vmul.f32 %v855, %v893
        %v905 = vmul.f32 %v856, %v897
        %v906 = vmul.f32 %v857, %v893
        %v907 = vmul.f32 %v858, %v897
        %v908 = vmul.f32 %v859, %v893
        %v909 = vmul.f32 %v860, %v897
        %v910 = vmul.f32 %v861, %v893
        %v911 = vmul.f32 %v862, %v897
        %v912 = vmul.f32 %v863, %v893
        %v913 = vmul.f32 %v864, %v897
        %v914 = vmul.f32 %v865, %v893
        %v915 = vmul.f32 %v866, %v897
        %v916 = vmul.f32 %v867, %v893
        %v917 = vmul.f32 %v868, %v897
        %v918 = vmul.f32 %v869, %v893
        %v919 = vmul.f32 %v870, %v897
        %v920 = vmul.f32 %v871, %v893
        %v921 = vmul.f32 %v872, %v897
        %v922 = vmul.f32 %v873, %v893
        %v923 = vmul.f32 %v874, %v897
        %v924 = vmul.f32 %v875, %v893
        %v925 = vmul.f32 %v876, %v897
        %v926 = vadd.f32 %v898, %v899
        %927 = vadd.xlane.f32.xlu0 %v926
        %v928 = vpop.xlane.xlu0 %927
        %v929 = vadd.f32 %v900, %v901
        %930 = vadd.xlane.f32.xlu0 %v929
        %v931 = vpop.xlane.xlu0 %930
        %v932 = vadd.f32 %v902, %v903
        %933 = vadd.xlane.f32.xlu0 %v932
        %v934 = vpop.xlane.xlu0 %933
        %v935 = vadd.f32 %v904, %v905
        %936 = vadd.xlane.f32.xlu0 %v935
        %v937 = vpop.xlane.xlu0 %936
        %v938 = vadd.f32 %v906, %v907
        %939 = vadd.xlane.f32.xlu0 %v938
        %v940 = vpop.xlane.xlu0 %939
        %v941 = vadd.f32 %v908, %v909
        %942 = vadd.xlane.f32.xlu0 %v941
        %v943 = vpop.xlane.xlu0 %942
        %v944 = vadd.f32 %v910, %v911
        %945 = vadd.xlane.f32.xlu0 %v944
        %v946 = vpop.xlane.xlu0 %945
        %v947 = vadd.f32 %v912, %v913
        %948 = vadd.xlane.f32.xlu0 %v947
        %v949 = vpop.xlane.xlu0 %948
        %v950 = vadd.f32 %v914, %v915
        %951 = vadd.xlane.f32.xlu0 %v950
        %v952 = vpop.xlane.xlu0 %951
        %v953 = vadd.f32 %v916, %v917
        %954 = vadd.xlane.f32.xlu0 %v953
        %v955 = vpop.xlane.xlu0 %954
        %v956 = vadd.f32 %v918, %v919
        %957 = vadd.xlane.f32.xlu0 %v956
        %v958 = vpop.xlane.xlu0 %957
        %v959 = vadd.f32 %v920, %v921
        %960 = vadd.xlane.f32.xlu0 %v959
        %v961 = vpop.xlane.xlu0 %960
        %v962 = vadd.f32 %v922, %v923
        %963 = vadd.xlane.f32.xlu0 %v962
        %v964 = vpop.xlane.xlu0 %963
        %v965 = vadd.f32 %v924, %v925
        %966 = vadd.xlane.f32.xlu0 %v965
        %v967 = vpop.xlane.xlu0 %966
        %v968 = vld [vmem:[#allocation2] sm:$0x1]
        %v970 = vlaneseq
        %v971 = vshrl.u32 %v970, 7
        %v972 = vsub.s32 0, %v971
        %v973 = vrot.slane %v968, %v972
        %v975 = vadd.f32 %v928, %v973
        %v976 = vadd.f32 %v931, %v973
        %v977 = vadd.f32 %v934, %v973
        %v978 = vadd.f32 %v937, %v973
        %v979 = vadd.f32 %v940, %v973
        %v980 = vadd.f32 %v943, %v973
        %v981 = vadd.f32 %v946, %v973
        %v982 = vadd.f32 %v949, %v973
        %v983 = vadd.f32 %v952, %v973
        %v984 = vadd.f32 %v955, %v973
        %v985 = vadd.f32 %v958, %v973
        %v986 = vadd.f32 %v961, %v973
        %v987 = vadd.f32 %v964, %v973
        %v988 = vadd.f32 %v967, %v973
        %vm989 = vcmask 7168
        %990 = vst.msk [vmem:[%s297] sm:$0xff] %vm989, %v975
        %991 = vst.msk [vmem:[%s297 + $0x8] sm:$0xff] %vm989, %v976
        %992 = vst.msk [vmem:[%s297 + $0x10] sm:$0xff] %vm989, %v977
        %993 = vst.msk [vmem:[%s297 + $0x18] sm:$0xff] %vm989, %v978
        %994 = vst.msk [vmem:[%s297 + $0x20] sm:$0xff] %vm989, %v979
        %995 = vst.msk [vmem:[%s297 + $0x28] sm:$0xff] %vm989, %v980
        %996 = vst.msk [vmem:[%s297 + $0x30] sm:$0xff] %vm989, %v981
        %997 = vst.msk [vmem:[%s297 + $0x38] sm:$0xff] %vm989, %v982
        %998 = vst.msk [vmem:[%s297 + $0x40] sm:$0xff] %vm989, %v983
        %999 = vst.msk [vmem:[%s297 + $0x48] sm:$0xff] %vm989, %v984
        %1000 = vst.msk [vmem:[%s297 + $0x50] sm:$0xff] %vm989, %v985
        %1001 = vst.msk [vmem:[%s297 + $0x58] sm:$0xff] %vm989, %v986
        %1002 = vst.msk [vmem:[%s297 + $0x60] sm:$0xff] %vm989, %v987
        %1003 = vst.msk [vmem:[%s297 + $0x68] sm:$0xff] %vm989, %v988
        %s1004 = sand.u32 %s181, 1
        %s1005 = sand.u32 %s181, 1
        %s1006 = smul.addr %s1005, 112
        %s1007 = scalar_lea.vmem [#allocation5], %s1006
        // Predicated region
        $region53: #{tpu_custom_call.1} parent=47 // pred_check
          %p1008 = pneg %p191
        $region54: #{tpu_custom_call.1} parent=47 // pred_check_branch
          %1010 = sbr.rel (%p1008) target = $region56
        $region55: #{tpu_custom_call.1} parent=47 // pred_region
          %s1011 = smul.u32 14, %s21
          %s1012 = ssub.s32 25, %s1011
          %p1013 = scmp.lt.s32.totalorder %s1012, 14
          %s1014 = scalar_select %p1013, %s1012, 14
          %s1015 = smul.u32 128, %s1014
          %p1016 = scmp.ne.s32.totalorder 0, %s1015
          %s1017 = smul.addr %s1011, 8
          %s1018 = scalar_lea.vmem %s7, %s1017
          // Predicated region
          $region57: #{tpu_custom_call.1} parent=55 // pred_check
            %p1019 = pneg %p1016
          $region58: #{tpu_custom_call.1} parent=55 // pred_check_branch
            %1021 = sbr.rel (%p1019) target = $region60
          $region59: #{tpu_custom_call.1} parent=55 // pred_region
            // Predicated region
            $region61: #{tpu_custom_call.1} parent=59 // pred_check
              _
            $region62: #{tpu_custom_call.1} parent=59 // pred_check_branch
              %1023 = sbr.rel (0) target = $region64
            $region63: #{tpu_custom_call.1} parent=59 // pred_region
              // Predicated region
              $region83: #{tpu_custom_call.1} parent=63 // pred_check
                _
              $region84: #{tpu_custom_call.1} parent=63 // pred_check_branch
                %1099 = sbr.rel (0) target = $region86
              $region85: #{tpu_custom_call.1} parent=63 // pred_region
                %s1100 = sdiv.u32.pop %s1014, 14
                %s1101 = srem.u32.pop %s1014, 14
                // While loop
                $region87: #{tpu_custom_call.1} parent=85 // loop_pre_header
                  _
                $region88: #{tpu_custom_call.1} parent=85 // loop_header
                  %s1103 = sphi 0, %s1105
                  %p1104 = scmp.ge.s32.totalorder %s1103, %s1100
                  %s1108 = sphi 0, %s1141
                  %s1109 = sphi %s1007, %s1144
                  %s1110 = sphi %s1018, %s1145
                $region89: #{tpu_custom_call.1} parent=85 // loop_header_branch
                  %1107 = sbr.rel (%p1104) target = $region93
                $region90: #{tpu_custom_call.1} parent=85 // loop_body
                  %v1111 = vld [vmem:[%s1109] sm:$0xff]
                  %1112 = vst [vmem:[%s1110] sm:$0xff] %v1111
                  %v1113 = vld [vmem:[%s1109 + $0x8] sm:$0xff]
                  %1114 = vst [vmem:[%s1110 + $0x8] sm:$0xff] %v1113
                  %v1115 = vld [vmem:[%s1109 + $0x10] sm:$0xff]
                  %1116 = vst [vmem:[%s1110 + $0x10] sm:$0xff] %v1115
                  %v1117 = vld [vmem:[%s1109 + $0x18] sm:$0xff]
                  %1118 = vst [vmem:[%s1110 + $0x18] sm:$0xff] %v1117
                  %v1119 = vld [vmem:[%s1109 + $0x20] sm:$0xff]
                  %1120 = vst [vmem:[%s1110 + $0x20] sm:$0xff] %v1119
                  %v1121 = vld [vmem:[%s1109 + $0x28] sm:$0xff]
                  %1122 = vst [vmem:[%s1110 + $0x28] sm:$0xff] %v1121
                  %v1123 = vld [vmem:[%s1109 + $0x30] sm:$0xff]
                  %1124 = vst [vmem:[%s1110 + $0x30] sm:$0xff] %v1123
                  %v1125 = vld [vmem:[%s1109 + $0x38] sm:$0xff]
                  %1126 = vst [vmem:[%s1110 + $0x38] sm:$0xff] %v1125
                  %v1127 = vld [vmem:[%s1109 + $0x40] sm:$0xff]
                  %1128 = vst [vmem:[%s1110 + $0x40] sm:$0xff] %v1127
                  %v1129 = vld [vmem:[%s1109 + $0x48] sm:$0xff]
                  %1130 = vst [vmem:[%s1110 + $0x48] sm:$0xff] %v1129
                  %v1131 = vld [vmem:[%s1109 + $0x50] sm:$0xff]
                  %1132 = vst [vmem:[%s1110 + $0x50] sm:$0xff] %v1131
                  %v1133 = vld [vmem:[%s1109 + $0x58] sm:$0xff]
                  %1134 = vst [vmem:[%s1110 + $0x58] sm:$0xff] %v1133
                  %v1135 = vld [vmem:[%s1109 + $0x60] sm:$0xff]
                  %1136 = vst [vmem:[%s1110 + $0x60] sm:$0xff] %v1135
                  %v1137 = vld [vmem:[%s1109 + $0x68] sm:$0xff]
                  %1138 = vst [vmem:[%s1110 + $0x68] sm:$0xff] %v1137
                  %s1139 = sadd.s32 1, %s1108
                  %p1140 = scmp.ge.s32.totalorder %s1139, %s1100
                  %s1141 = scalar_select %p1140, 0, %s1139
                  %s1142 = smul.u32 %s1141, 112
                  %s1143 = smul.u32 %s1141, 112
                  %s1144 = scalar_lea.vmem %s1007, %s1142 [#allocation5]
                  %s1145 = scalar_lea.vmem %s1018, %s1143
                $region91: #{tpu_custom_call.1} parent=85 // loop_footer
                  %s1105 = sadd.s32 %s1103, 1
                $region92: #{tpu_custom_call.1} parent=85 // loop_footer_branch
                  %1102 = sbr.rel target = $region88
                $region93: #{tpu_custom_call.1} parent=85 // loop_exit
                  _
                %s1146 = sdiv.u32.pop %s1014, 14
                %s1147 = srem.u32.pop %s1014, 14
                %s1148 = smul.u32 %s1146, 14
                %s1149 = smul.u32 8, %s1148
                %s1150 = scalar_lea.vmem %s1007, %s1149 [#allocation5]
                %s1151 = smul.u32 8, %s1148
                %s1152 = scalar_lea.vmem %s1018, %s1151
                // While loop
                $region94: #{tpu_custom_call.1} parent=85 // loop_pre_header
                  _
                $region95: #{tpu_custom_call.1} parent=85 // loop_header
                  %s1154 = sphi 0, %s1156
                  %p1155 = scmp.ge.s32.totalorder %s1154, %s1147
                  %s1159 = sphi 0, %s1166
                  %s1160 = sphi %s1150, %s1169
                  %s1161 = sphi %s1152, %s1170
                $region96: #{tpu_custom_call.1} parent=85 // loop_header_branch
                  %1158 = sbr.rel (%p1155) target = $region100
                $region97: #{tpu_custom_call.1} parent=85 // loop_body
                  %v1162 = vld [vmem:[%s1160] sm:$0xff]
                  %1163 = vst [vmem:[%s1161] sm:$0xff] %v1162
                  %s1164 = sadd.s32 1, %s1159
                  %p1165 = scmp.ge.s32.totalorder %s1164, %s1147
                  %s1166 = scalar_select %p1165, 0, %s1164
                  %s1167 = smul.u32 %s1166, 8
                  %s1168 = smul.u32 %s1166, 8
                  %s1169 = scalar_lea.vmem %s1150, %s1167 [#allocation5]
                  %s1170 = scalar_lea.vmem %s1152, %s1168
                $region98: #{tpu_custom_call.1} parent=85 // loop_footer
                  %s1156 = sadd.s32 %s1154, 1
                $region99: #{tpu_custom_call.1} parent=85 // loop_footer_branch
                  %1153 = sbr.rel target = $region95
                $region100: #{tpu_custom_call.1} parent=85 // loop_exit
                  _
              $region86: #{tpu_custom_call.1} parent=63 // pred_fallthru
                _
              // Predicated region
              $region101: #{tpu_custom_call.1} parent=63 // pred_check
                _
              $region102: #{tpu_custom_call.1} parent=63 // pred_check_branch
                %1172 = sbr.rel target = $region104
              $region103: #{tpu_custom_call.1} parent=63 // pred_region
                _
              $region104: #{tpu_custom_call.1} parent=63 // pred_fallthru
                _
            $region64: #{tpu_custom_call.1} parent=59 // pred_fallthru
              _
            // Predicated region
            $region65: #{tpu_custom_call.1} parent=59 // pred_check
              _
            $region66: #{tpu_custom_call.1} parent=59 // pred_check_branch
              %1025 = sbr.rel target = $region68
            $region67: #{tpu_custom_call.1} parent=59 // pred_region
              %s1027 = sdiv.u32.pop %s1014, 14
              %s1028 = srem.u32.pop %s1014, 14
              // While loop
              $region69: #{tpu_custom_call.1} parent=67 // loop_pre_header
                _
              $region70: #{tpu_custom_call.1} parent=67 // loop_header
                %s1030 = sphi 0, %s1032
                %p1031 = scmp.ge.s32.totalorder %s1030, %s1027
                %s1035 = sphi 0, %s1068
                %s1036 = sphi %s1007, %s1071
                %s1037 = sphi %s1018, %s1072
              $region71: #{tpu_custom_call.1} parent=67 // loop_header_branch
                %1034 = sbr.rel (%p1031) target = $region75
              $region72: #{tpu_custom_call.1} parent=67 // loop_body
                %v1038 = vld [vmem:[%s1036] sm:$0xff]
                %1039 = vst [vmem:[%s1037] sm:$0xff] %v1038
                %v1040 = vld [vmem:[%s1036 + $0x8] sm:$0xff]
                %1041 = vst [vmem:[%s1037 + $0x8] sm:$0xff] %v1040
                %v1042 = vld [vmem:[%s1036 + $0x10] sm:$0xff]
                %1043 = vst [vmem:[%s1037 + $0x10] sm:$0xff] %v1042
                %v1044 = vld [vmem:[%s1036 + $0x18] sm:$0xff]
                %1045 = vst [vmem:[%s1037 + $0x18] sm:$0xff] %v1044
                %v1046 = vld [vmem:[%s1036 + $0x20] sm:$0xff]
                %1047 = vst [vmem:[%s1037 + $0x20] sm:$0xff] %v1046
                %v1048 = vld [vmem:[%s1036 + $0x28] sm:$0xff]
                %1049 = vst [vmem:[%s1037 + $0x28] sm:$0xff] %v1048
                %v1050 = vld [vmem:[%s1036 + $0x30] sm:$0xff]
                %1051 = vst [vmem:[%s1037 + $0x30] sm:$0xff] %v1050
                %v1052 = vld [vmem:[%s1036 + $0x38] sm:$0xff]
                %1053 = vst [vmem:[%s1037 + $0x38] sm:$0xff] %v1052
                %v1054 = vld [vmem:[%s1036 + $0x40] sm:$0xff]
                %1055 = vst [vmem:[%s1037 + $0x40] sm:$0xff] %v1054
                %v1056 = vld [vmem:[%s1036 + $0x48] sm:$0xff]
                %1057 = vst [vmem:[%s1037 + $0x48] sm:$0xff] %v1056
                %v1058 = vld [vmem:[%s1036 + $0x50] sm:$0xff]
                %1059 = vst [vmem:[%s1037 + $0x50] sm:$0xff] %v1058
                %v1060 = vld [vmem:[%s1036 + $0x58] sm:$0xff]
                %1061 = vst [vmem:[%s1037 + $0x58] sm:$0xff] %v1060
                %v1062 = vld [vmem:[%s1036 + $0x60] sm:$0xff]
                %1063 = vst [vmem:[%s1037 + $0x60] sm:$0xff] %v1062
                %v1064 = vld [vmem:[%s1036 + $0x68] sm:$0xff]
                %1065 = vst [vmem:[%s1037 + $0x68] sm:$0xff] %v1064
                %s1066 = sadd.s32 1, %s1035
                %p1067 = scmp.ge.s32.totalorder %s1066, %s1027
                %s1068 = scalar_select %p1067, 0, %s1066
                %s1069 = smul.u32 %s1068, 112
                %s1070 = smul.u32 %s1068, 112
                %s1071 = scalar_lea.vmem %s1007, %s1069 [#allocation5]
                %s1072 = scalar_lea.vmem %s1018, %s1070
              $region73: #{tpu_custom_call.1} parent=67 // loop_footer
                %s1032 = sadd.s32 %s1030, 1
              $region74: #{tpu_custom_call.1} parent=67 // loop_footer_branch
                %1029 = sbr.rel target = $region70
              $region75: #{tpu_custom_call.1} parent=67 // loop_exit
                _
              %s1073 = sdiv.u32.pop %s1014, 14
              %s1074 = srem.u32.pop %s1014, 14
              %s1075 = smul.u32 %s1073, 14
              %s1076 = smul.u32 8, %s1075
              %s1077 = scalar_lea.vmem %s1007, %s1076 [#allocation5]
              %s1078 = smul.u32 8, %s1075
              %s1079 = scalar_lea.vmem %s1018, %s1078
              // While loop
              $region76: #{tpu_custom_call.1} parent=67 // loop_pre_header
                _
              $region77: #{tpu_custom_call.1} parent=67 // loop_header
                %s1081 = sphi 0, %s1083
                %p1082 = scmp.ge.s32.totalorder %s1081, %s1074
                %s1086 = sphi 0, %s1093
                %s1087 = sphi %s1077, %s1096
                %s1088 = sphi %s1079, %s1097
              $region78: #{tpu_custom_call.1} parent=67 // loop_header_branch
                %1085 = sbr.rel (%p1082) target = $region82
              $region79: #{tpu_custom_call.1} parent=67 // loop_body
                %v1089 = vld [vmem:[%s1087] sm:$0xff]
                %1090 = vst [vmem:[%s1088] sm:$0xff] %v1089
                %s1091 = sadd.s32 1, %s1086
                %p1092 = scmp.ge.s32.totalorder %s1091, %s1074
                %s1093 = scalar_select %p1092, 0, %s1091
                %s1094 = smul.u32 %s1093, 8
                %s1095 = smul.u32 %s1093, 8
                %s1096 = scalar_lea.vmem %s1077, %s1094 [#allocation5]
                %s1097 = scalar_lea.vmem %s1079, %s1095
              $region80: #{tpu_custom_call.1} parent=67 // loop_footer
                %s1083 = sadd.s32 %s1081, 1
              $region81: #{tpu_custom_call.1} parent=67 // loop_footer_branch
                %1080 = sbr.rel target = $region77
              $region82: #{tpu_custom_call.1} parent=67 // loop_exit
                _
            $region68: #{tpu_custom_call.1} parent=59 // pred_fallthru
              _
          $region60: #{tpu_custom_call.1} parent=55 // pred_fallthru
            _
          %1173 = vnop
        $region56: #{tpu_custom_call.1} parent=47 // pred_fallthru
          _
      $region48: #{tpu_custom_call.1} parent=5 // pred_fallthru
        _
      %p1174 = scmp.le.s32.totalorder 2, %s16
      // Predicated region
      $region105: #{tpu_custom_call.1} parent=5 // pred_check
        %p1175 = pneg %p1174
      $region106: #{tpu_custom_call.1} parent=5 // pred_check_branch
        %1177 = sbr.rel (%p1175) target = $region108
      $region107: #{tpu_custom_call.1} parent=5 // pred_region
        %s1178 = ssub.s32 %s16, 2
        // Predicated region
        $region109: #{tpu_custom_call.1} parent=107 // pred_check
          %p1179 = pneg %p197
        $region110: #{tpu_custom_call.1} parent=107 // pred_check_branch
          %1181 = sbr.rel (%p1179) target = $region112
        $region111: #{tpu_custom_call.1} parent=107 // pred_region
          %s1182 = sand.u32 %s182, 1
          %s1183 = sand.u32 %s182, 1
          %s1184 = smul.addr %s1183, 112
          %s1185 = scalar_lea.vmem [#allocation5], %s1184
        $region112: #{tpu_custom_call.1} parent=107 // pred_fallthru
          _
      $region108: #{tpu_custom_call.1} parent=5 // pred_fallthru
        _
    $region6: #{tpu_custom_call.1} parent=1 // loop_footer
      %s20 = sadd.s32 1, %s16
    $region7: #{tpu_custom_call.1} parent=1 // loop_footer_branch
      %15 = sbr.rel target = $region3
    $region8: #{tpu_custom_call.1} parent=1 // loop_exit
      _
    %1186 = vsyncpa [#allocation4], 1
    %s1187 = scalar_lea.sflag [#allocation4], 1
    %1188 = vsyncpa %s1187, 1

</llo_original>
